<compile_context>
chip_gen: v7x
topology: tpu7x:2x2x1
jax: 0.10.0
libtpu: 0.0.40
codegen_flags: <defaults>
</compile_context>

<pallas_src>
from functools import partial

import jax
import jax.numpy as jnp
from jax.experimental import pallas as pl
from jax.experimental.pallas import tpu as pltpu

# ---------------- small demo config (consistent with the module) ----------------
CHANNELS = 32            # depthwise conv groups == channels
H = 16
W = 16                   # power of two (cheap bit-ops for the column mask)
HW = H * W               # 256 lanes -> lane-dense slab
CHANNEL_BLOCK = 16       # channels per grid step (multiple of 8 sublanes)


# ---------------- fused Pallas kernel ----------------
def _edge_silu_kernel(x_ref, w_ref, b_ref, o_ref, *, width):
    """Fused EdgeAwareSILU on one channel block.

    x_ref: (Cb, H*W) f32 — channels on sublanes, flattened spatial on lanes.
    w_ref: (Cb, 9)   f32 — folded depthwise 3x3 taps, row-major over (di, dj).
    b_ref: (Cb, 1)   f32 — folded bias.
    o_ref: (Cb, H*W) f32 — x * sigmoid(dwconv_folded(x)).
    """
    x = x_ref[...]
    wts = w_ref[...]
    cb, hw = x.shape

    # Boundary-validity masks on the flattened (row-major) spatial axis.
    lane = jax.lax.broadcasted_iota(jnp.int32, (1, hw), 1)
    wcol = lane & (width - 1)                              # w coordinate
    mask_l = (wcol >= 1).astype(x.dtype)                   # w-1 >= 0   (dj = -1)
    mask_r = (wcol <= width - 2).astype(x.dtype)           # w+1 <= W-1 (dj = +1)
    mask_t = (lane >= width).astype(x.dtype)                # h-1 >= 0   (di = -1)
    mask_b = (lane < hw - width).astype(x.dtype)            # h+1 <= H-1 (di = +1)

    # Column (dj) shifts: one XLU lane rotation per side on the unpadded,
    # 128-aligned slab; the circular wrap is killed once by the column mask.
    # pltpu.roll matches jnp.roll: result[p] = x[(p - shift) mod hw].
    x_m = pltpu.roll(x, 1, axis=1) * mask_l                 # x[p-1]  (dj = -1)
    x_p = pltpu.roll(x, hw - 1, axis=1) * mask_r            # x[p+1]  (dj = +1)

    # Per-row weighted sums r_di[q] = sum_dj w[di,dj] * x[q+dj]  (9 per-channel FMAs).
    def row_sum(t):  # t = 3*(di+1); taps are row-major over (di, dj)
        return (x_m * wts[:, t:t + 1]
                + x * wts[:, t + 1:t + 2]
                + x_p * wts[:, t + 2:t + 3])

    r_top = row_sum(0)      # di = -1
    r_mid = row_sum(3)      # di =  0
    r_bot = row_sum(6)      # di = +1

    # Row (di) shifts: out[p] = r_top[p-W] + r_mid[p] + r_bot[p+W];
    # the circular wrap across the top/bottom rows is killed by the row masks.
    acc = (r_mid
           + pltpu.roll(r_top, width, axis=1) * mask_t
           + pltpu.roll(r_bot, hw - width, axis=1) * mask_b)

    z = acc + b_ref[...]                                    # folded conv output
    sig = 1.0 / (1.0 + jnp.exp(-z))                         # exact sigmoid (exp on EUP)
    o_ref[...] = x * sig


# ---------------- wrapper ----------------
def edge_aware_silu_forward(x_chw, conv_w, conv_b, alpha, *,
                            channel_block=CHANNEL_BLOCK):
    """x_chw: (C, H, W). Returns (1, C, H, W) = x * sigmoid(x + alpha*(dwconv(x) - x))."""
    c, h, w = x_chw.shape
    hw = h * w
    assert (w & (w - 1)) == 0, "W must be a power of two (column-mask bit ops)"
    assert hw % 128 == 0, "flattened spatial extent must be lane-dense"
    cb = min(channel_block, c)
    assert c % cb == 0 and cb % 8 == 0

    # Trace-time folding of alpha + residual into the depthwise conv:
    #   x + alpha*(conv_{w,b}(x) - x) = dwconv(x; alpha*w + (1-alpha)*I, alpha*b)
    wf = alpha * conv_w
    wf = wf.at[:, 1, 1].add(1.0 - alpha)
    w9 = wf.reshape(c, 9)
    bf = (alpha * conv_b).reshape(c, 1)

    x2 = x_chw.reshape(c, hw)          # free reshape; channel-major lane-dense slab

    out2 = pl.pallas_call(
        partial(_edge_silu_kernel, width=w),
        out_shape=jax.ShapeDtypeStruct((c, hw), jnp.float32),
        grid=(c // cb,),
        in_specs=[
            pl.BlockSpec((cb, hw), lambda i: (i, 0)),
            pl.BlockSpec((cb, 9), lambda i: (i, 0)),
            pl.BlockSpec((cb, 1), lambda i: (i, 0)),
        ],
        out_specs=pl.BlockSpec((cb, hw), lambda i: (i, 0)),
        compiler_params=pltpu.CompilerParams(dimension_semantics=("parallel",)),
    )(x2, w9, bf)

    # Matches torch's x.unsqueeze(0): output is [1, C, H, W]; reshape is free.
    return out2.reshape(1, c, h, w)


# ---------------- pure-JAX reference (for correctness check) ----------------
def edge_aware_silu_reference(x_chw, conv_w, conv_b, alpha):
    x = x_chw[None]                                         # (1, C, H, W)
    c = x.shape[1]
    wdw = conv_w[:, None, :, :]                             # (C, 1, 3, 3) OIHW, groups=C
    conv = jax.lax.conv_general_dilated(
        x, wdw, window_strides=(1, 1), padding=((1, 1), (1, 1)),
        dimension_numbers=("NCHW", "OIHW", "NCHW"), feature_group_count=c)
    conv = conv + conv_b.reshape(1, c, 1, 1)
    edge = conv - x
    return x * jax.nn.sigmoid(x + alpha * edge)


if __name__ == "__main__":
    key = jax.random.PRNGKey(0)
    kx, kw, kb = jax.random.split(key, 3)
    x = jax.random.normal(kx, (CHANNELS, H, W), jnp.float32)
    conv_w = 0.3 * jax.random.normal(kw, (CHANNELS, 3, 3), jnp.float32)
    conv_b = 0.1 * jax.random.normal(kb, (CHANNELS,), jnp.float32)
    alpha = jnp.float32(0.75)   # torch init is 1.0; non-trivial value exercises the folding

    out = jax.jit(edge_aware_silu_forward)(x, conv_w, conv_b, alpha)
    out = jax.block_until_ready(out)

    ref = edge_aware_silu_reference(x, conv_w, conv_b, alpha)
    assert out.shape == (1, CHANNELS, H, W)
    max_err = float(jnp.max(jnp.abs(out - ref)))
    assert max_err < 1e-4, f"mismatch vs reference: max abs err = {max_err}"
    print("KERNEL_OK")
</pallas_src>

<mosaic_0001>
module attributes {stable_mosaic.version = 11 : i64} {
  func.func @_edge_silu_kernel(%arg0: i32, %arg1: memref<16x256xf32, #tpu.memory_space<vmem>>, %arg2: memref<16x9xf32, #tpu.memory_space<vmem>>, %arg3: memref<16x1xf32, #tpu.memory_space<vmem>>, %arg4: memref<16x256xf32, #tpu.memory_space<vmem>>) attributes {dimension_semantics = [#tpu.dimension_semantics<parallel>], iteration_bounds = array<i64: 2>, scalar_prefetch = 0 : i64, scratch_operands = 0 : i64, tpu.core_type = #tpu.core_type<tc>, window_params = [{transform_indices = @transform_0, window_bounds = array<i64: 16, 256>}, {transform_indices = @transform_1, window_bounds = array<i64: 16, 9>}, {transform_indices = @transform_2, window_bounds = array<i64: 16, 1>}, {transform_indices = @transform_3, window_bounds = array<i64: 16, 256>}]} {
    %c0 = arith.constant 0 : index
    %c0_0 = arith.constant 0 : index
    %0 = vector.load %arg1[%c0, %c0_0] : memref<16x256xf32, #tpu.memory_space<vmem>>, vector<16x256xf32>
    %c0_1 = arith.constant 0 : index
    %c0_2 = arith.constant 0 : index
    %1 = vector.load %arg2[%c0_1, %c0_2] : memref<16x9xf32, #tpu.memory_space<vmem>>, vector<16x9xf32>
    %2 = tpu.iota {dimensions = array<i32: 1>} : vector<1x256xi32>
    %c15_i32 = arith.constant 15 : i32
    %3 = vector.broadcast %c15_i32 : i32 to vector<1x256xi32>
    %4 = arith.andi %2, %3 : vector<1x256xi32>
    %c1_i32 = arith.constant 1 : i32
    %5 = vector.broadcast %c1_i32 : i32 to vector<1x256xi32>
    %6 = arith.cmpi sge, %4, %5 : vector<1x256xi32>
    %7 = arith.extui %6 : vector<1x256xi1> to vector<1x256xi32>
    %8 = arith.sitofp %7 : vector<1x256xi32> to vector<1x256xf32>
    %c14_i32 = arith.constant 14 : i32
    %9 = vector.broadcast %c14_i32 : i32 to vector<1x256xi32>
    %10 = arith.cmpi sle, %4, %9 : vector<1x256xi32>
    %11 = arith.extui %10 : vector<1x256xi1> to vector<1x256xi32>
    %12 = arith.sitofp %11 : vector<1x256xi32> to vector<1x256xf32>
    %c16_i32 = arith.constant 16 : i32
    %13 = vector.broadcast %c16_i32 : i32 to vector<1x256xi32>
    %14 = arith.cmpi sge, %2, %13 : vector<1x256xi32>
    %15 = arith.extui %14 : vector<1x256xi1> to vector<1x256xi32>
    %16 = arith.sitofp %15 : vector<1x256xi32> to vector<1x256xf32>
    %c240_i32 = arith.constant 240 : i32
    %17 = vector.broadcast %c240_i32 : i32 to vector<1x256xi32>
    %18 = arith.cmpi slt, %2, %17 : vector<1x256xi32>
    %19 = arith.extui %18 : vector<1x256xi1> to vector<1x256xi32>
    %20 = arith.sitofp %19 : vector<1x256xi32> to vector<1x256xf32>
    %c1_i32_3 = arith.constant 1 : i32
    %21 = tpu.dynamic_rotate %0 by %c1_i32_3 dim 1 : vector<16x256xf32>, i32 -> vector<16x256xf32>
    %22 = vector.broadcast %8 : vector<1x256xf32> to vector<16x256xf32>
    %23 = arith.mulf %21, %22 : vector<16x256xf32>
    %c255_i32 = arith.constant 255 : i32
    %24 = tpu.dynamic_rotate %0 by %c255_i32 dim 1 : vector<16x256xf32>, i32 -> vector<16x256xf32>
    %25 = vector.broadcast %12 : vector<1x256xf32> to vector<16x256xf32>
    %26 = arith.mulf %24, %25 : vector<16x256xf32>
    %27 = vector.extract_strided_slice %1 {offsets = [0, 0], sizes = [16, 1], strides = [1, 1]} : vector<16x9xf32> to vector<16x1xf32>
    %28 = vector.broadcast %27 : vector<16x1xf32> to vector<16x256xf32>
    %29 = arith.mulf %23, %28 : vector<16x256xf32>
    %30 = vector.extract_strided_slice %1 {offsets = [0, 1], sizes = [16, 1], strides = [1, 1]} : vector<16x9xf32> to vector<16x1xf32>
    %31 = vector.broadcast %30 : vector<16x1xf32> to vector<16x256xf32>
    %32 = arith.mulf %0, %31 : vector<16x256xf32>
    %33 = arith.addf %29, %32 : vector<16x256xf32>
    %34 = vector.extract_strided_slice %1 {offsets = [0, 2], sizes = [16, 1], strides = [1, 1]} : vector<16x9xf32> to vector<16x1xf32>
    %35 = vector.broadcast %34 : vector<16x1xf32> to vector<16x256xf32>
    %36 = arith.mulf %26, %35 : vector<16x256xf32>
    %37 = arith.addf %33, %36 : vector<16x256xf32>
    %38 = vector.extract_strided_slice %1 {offsets = [0, 3], sizes = [16, 1], strides = [1, 1]} : vector<16x9xf32> to vector<16x1xf32>
    %39 = vector.broadcast %38 : vector<16x1xf32> to vector<16x256xf32>
    %40 = arith.mulf %23, %39 : vector<16x256xf32>
    %41 = vector.extract_strided_slice %1 {offsets = [0, 4], sizes = [16, 1], strides = [1, 1]} : vector<16x9xf32> to vector<16x1xf32>
    %42 = vector.broadcast %41 : vector<16x1xf32> to vector<16x256xf32>
    %43 = arith.mulf %0, %42 : vector<16x256xf32>
    %44 = arith.addf %40, %43 : vector<16x256xf32>
    %45 = vector.extract_strided_slice %1 {offsets = [0, 5], sizes = [16, 1], strides = [1, 1]} : vector<16x9xf32> to vector<16x1xf32>
    %46 = vector.broadcast %45 : vector<16x1xf32> to vector<16x256xf32>
    %47 = arith.mulf %26, %46 : vector<16x256xf32>
    %48 = arith.addf %44, %47 : vector<16x256xf32>
    %49 = vector.extract_strided_slice %1 {offsets = [0, 6], sizes = [16, 1], strides = [1, 1]} : vector<16x9xf32> to vector<16x1xf32>
    %50 = vector.broadcast %49 : vector<16x1xf32> to vector<16x256xf32>
    %51 = arith.mulf %23, %50 : vector<16x256xf32>
    %52 = vector.extract_strided_slice %1 {offsets = [0, 7], sizes = [16, 1], strides = [1, 1]} : vector<16x9xf32> to vector<16x1xf32>
    %53 = vector.broadcast %52 : vector<16x1xf32> to vector<16x256xf32>
    %54 = arith.mulf %0, %53 : vector<16x256xf32>
    %55 = arith.addf %51, %54 : vector<16x256xf32>
    %56 = vector.extract_strided_slice %1 {offsets = [0, 8], sizes = [16, 1], strides = [1, 1]} : vector<16x9xf32> to vector<16x1xf32>
    %57 = vector.broadcast %56 : vector<16x1xf32> to vector<16x256xf32>
    %58 = arith.mulf %26, %57 : vector<16x256xf32>
    %59 = arith.addf %55, %58 : vector<16x256xf32>
    %c16_i32_4 = arith.constant 16 : i32
    %60 = tpu.dynamic_rotate %37 by %c16_i32_4 dim 1 : vector<16x256xf32>, i32 -> vector<16x256xf32>
    %61 = vector.broadcast %16 : vector<1x256xf32> to vector<16x256xf32>
    %62 = arith.mulf %60, %61 : vector<16x256xf32>
    %63 = arith.addf %48, %62 : vector<16x256xf32>
    %c240_i32_5 = arith.constant 240 : i32
    %64 = tpu.dynamic_rotate %59 by %c240_i32_5 dim 1 : vector<16x256xf32>, i32 -> vector<16x256xf32>
    %65 = vector.broadcast %20 : vector<1x256xf32> to vector<16x256xf32>
    %66 = arith.mulf %64, %65 : vector<16x256xf32>
    %67 = arith.addf %63, %66 : vector<16x256xf32>
    %c0_6 = arith.constant 0 : index
    %c0_7 = arith.constant 0 : index
    %68 = vector.load %arg3[%c0_6, %c0_7] : memref<16x1xf32, #tpu.memory_space<vmem>>, vector<16x1xf32>
    %69 = vector.broadcast %68 : vector<16x1xf32> to vector<16x256xf32>
    %70 = arith.addf %67, %69 : vector<16x256xf32>
    %cst = arith.constant 0.000000e+00 : f32
    %71 = vector.broadcast %cst : f32 to vector<16x256xf32>
    %72 = arith.subf %71, %70 : vector<16x256xf32>
    %73 = math.exp %72 : vector<16x256xf32>
    %cst_8 = arith.constant 1.000000e+00 : f32
    %74 = vector.broadcast %cst_8 : f32 to vector<16x256xf32>
    %75 = arith.addf %74, %73 : vector<16x256xf32>
    %cst_9 = arith.constant 1.000000e+00 : f32
    %76 = vector.broadcast %cst_9 : f32 to vector<16x256xf32>
    %77 = arith.divf %76, %75 : vector<16x256xf32>
    %78 = arith.mulf %0, %77 : vector<16x256xf32>
    %c0_10 = arith.constant 0 : index
    %c0_11 = arith.constant 0 : index
    %79 = vector.load %arg4[%c0_10, %c0_11] : memref<16x256xf32, #tpu.memory_space<vmem>>, vector<16x256xf32>
    tpu.vector_store %arg4[%c0_10, %c0_11], %78 {strides = array<i32>} : memref<16x256xf32, #tpu.memory_space<vmem>>, vector<16x256xf32>,
    return
  }
  func.func @transform_0(%arg0: i32) -> (i32, i32) {
    %c0_i32 = arith.constant 0 : i32
    %c0_i32_0 = arith.constant 0 : i32
    return %arg0, %c0_i32 : i32, i32
  }
  func.func @transform_1(%arg0: i32) -> (i32, i32) {
    %c0_i32 = arith.constant 0 : i32
    %c0_i32_0 = arith.constant 0 : i32
    return %arg0, %c0_i32 : i32, i32
  }
  func.func @transform_2(%arg0: i32) -> (i32, i32) {
    %c0_i32 = arith.constant 0 : i32
    %c0_i32_0 = arith.constant 0 : i32
    return %arg0, %c0_i32 : i32, i32
  }
  func.func @transform_3(%arg0: i32) -> (i32, i32) {
    %c0_i32 = arith.constant 0 : i32
    %c0_i32_0 = arith.constant 0 : i32
    return %arg0, %c0_i32 : i32, i32
  }
}

</mosaic_0001>

<llo_original>
// kernel: edge_aware_silu_forward.1
$region0: #{edge_aware_silu_forward.1}
  #allocation0 [shape = 'u32[]', space=smem, size = 0x4, offset = 0x4, fixed_abs, tag = 'smem constant byte address 0x4 - core index']
  #allocation1 [shape = 'u32[144,128]{1,0:T(1,128)}', space=vmem, size = 0x12000, scoped, tag = 'internal scratch']
  %s0 = inlined_call_operand.vmem [shape: f32[32,256], index: 0, kind: input, shape index: {}]
  %s1 = inlined_call_operand.vmem [shape: f32[32,9], index: 1, kind: input, shape index: {}]
  %s2 = inlined_call_operand.vmem [shape: f32[32,1], index: 2, kind: input, shape index: {}]
  %s3 = inlined_call_operand.vmem [shape: f32[32,256], index: 3, kind: output, shape index: {}]
  %s4 = sld [smem:[#allocation0]]
  $region45: #{edge_aware_silu_forward.1} parent=0
    _
  %s6 = ssub.s32 1, %s4
  %s7 = scalar_select 0, %s6, %s4
  loop: start=0, step=1, limit=4
  $region2: #{edge_aware_silu_forward.1} parent=0 // loop_pre_header
    _
  $region3: #{edge_aware_silu_forward.1} parent=0 // loop_header
    %s9 = sphi 0, %s13
    %p10 = scmp.ge.s32.totalorder %s9, 4
    %s19 = sphi 0, %s21
    %s22 = sphi 0, %s19
    %s23 = sphi 0, %s22
    %s39 = sphi 0, %s23
    %s45 = sphi 0, %s47
    %s48 = sphi 0, %s45
    %s49 = sphi 0, %s48
    %s65 = sphi 0, %s49
    %s71 = sphi 0, %s73
    %s74 = sphi 0, %s71
    %s75 = sphi 0, %s74
    %s91 = sphi 0, %s75
    %s97 = sphi 0, %s99
    %s100 = sphi 0, %s97
    %s101 = sphi 0, %s100
    %s117 = sphi 0, %s101
  $region4: #{edge_aware_silu_forward.1} parent=0 // loop_header_branch
    %12 = sbr.rel (%p10) target = $region8
  $region5: #{edge_aware_silu_forward.1} parent=0 // loop_body
    %s14 = ssub.s32 %s9, 1
    %s15 = ssub.s32 %s9, 2
    %s16 = sadd.s32 %s9, 1
    %s17 = ssub.s32 %s9, %s16
    %p18 = scmp.eq.s32.totalorder %s17, 0
    %s20 = sadd.s32 %s19, 1
    %s21 = scalar_select %p18, %s19, %s20
    %p24 = pneg %p18
    %p25 = scmp.eq.s32.totalorder %s9, 1
    %p26 = por %p24, %p25
    %p27 = scmp.ne.s32.totalorder %s19, %s22
    %p28 = scmp.eq.s32.totalorder %s9, 0
    %p29 = por %p27, %p28
    %p30 = scmp.ne.s32.totalorder %s19, %s22
    %p31 = scmp.eq.s32.totalorder %s14, 1
    %p32 = por %p30, %p31
    %p33 = scmp.ne.s32.totalorder %s22, %s23
    %p34 = scmp.eq.s32.totalorder %s14, 0
    %p35 = por %p33, %p34
    %p36 = scmp.ne.s32.totalorder %s22, %s23
    %p37 = scmp.eq.s32.totalorder %s15, 1
    %p38 = por %p36, %p37
    %p40 = scmp.ne.s32.totalorder %s23, %s39
    %p41 = scmp.eq.s32.totalorder %s15, 0
    %p42 = por %p40, %p41
    %s43 = ssub.s32 %s9, %s16
    %p44 = scmp.eq.s32.totalorder %s43, 0
    %s46 = sadd.s32 %s45, 1
    %s47 = scalar_select %p44, %s45, %s46
    %p50 = pneg %p44
    %p51 = scmp.eq.s32.totalorder %s9, 1
    %p52 = por %p50, %p51
    %p53 = scmp.ne.s32.totalorder %s45, %s48
    %p54 = scmp.eq.s32.totalorder %s9, 0
    %p55 = por %p53, %p54
    %p56 = scmp.ne.s32.totalorder %s45, %s48
    %p57 = scmp.eq.s32.totalorder %s14, 1
    %p58 = por %p56, %p57
    %p59 = scmp.ne.s32.totalorder %s48, %s49
    %p60 = scmp.eq.s32.totalorder %s14, 0
    %p61 = por %p59, %p60
    %p62 = scmp.ne.s32.totalorder %s48, %s49
    %p63 = scmp.eq.s32.totalorder %s15, 1
    %p64 = por %p62, %p63
    %p66 = scmp.ne.s32.totalorder %s49, %s65
    %p67 = scmp.eq.s32.totalorder %s15, 0
    %p68 = por %p66, %p67
    %s69 = ssub.s32 %s9, %s16
    %p70 = scmp.eq.s32.totalorder %s69, 0
    %s72 = sadd.s32 %s71, 1
    %s73 = scalar_select %p70, %s71, %s72
    %p76 = pneg %p70
    %p77 = scmp.eq.s32.totalorder %s9, 1
    %p78 = por %p76, %p77
    %p79 = scmp.ne.s32.totalorder %s71, %s74
    %p80 = scmp.eq.s32.totalorder %s9, 0
    %p81 = por %p79, %p80
    %p82 = scmp.ne.s32.totalorder %s71, %s74
    %p83 = scmp.eq.s32.totalorder %s14, 1
    %p84 = por %p82, %p83
    %p85 = scmp.ne.s32.totalorder %s74, %s75
    %p86 = scmp.eq.s32.totalorder %s14, 0
    %p87 = por %p85, %p86
    %p88 = scmp.ne.s32.totalorder %s74, %s75
    %p89 = scmp.eq.s32.totalorder %s15, 1
    %p90 = por %p88, %p89
    %p92 = scmp.ne.s32.totalorder %s75, %s91
    %p93 = scmp.eq.s32.totalorder %s15, 0
    %p94 = por %p92, %p93
    %s95 = ssub.s32 %s9, %s16
    %p96 = scmp.eq.s32.totalorder %s95, 0
    %s98 = sadd.s32 %s97, 1
    %s99 = scalar_select %p96, %s97, %s98
    %p102 = pneg %p96
    %p103 = scmp.eq.s32.totalorder %s9, 1
    %p104 = por %p102, %p103
    %p105 = scmp.ne.s32.totalorder %s97, %s100
    %p106 = scmp.eq.s32.totalorder %s9, 0
    %p107 = por %p105, %p106
    %p108 = scmp.ne.s32.totalorder %s97, %s100
    %p109 = scmp.eq.s32.totalorder %s14, 1
    %p110 = por %p108, %p109
    %p111 = scmp.ne.s32.totalorder %s100, %s101
    %p112 = scmp.eq.s32.totalorder %s14, 0
    %p113 = por %p111, %p112
    %p114 = scmp.ne.s32.totalorder %s100, %s101
    %p115 = scmp.eq.s32.totalorder %s15, 1
    %p116 = por %p114, %p115
    %p118 = scmp.ne.s32.totalorder %s101, %s117
    %p119 = scmp.eq.s32.totalorder %s15, 0
    %p120 = por %p118, %p119
    %p121 = scmp.le.s32.totalorder 1, %s9
    %p122 = scmp.lt.s32.totalorder %s9, 3
    %p123 = pnand %p121, %p122
    %p124 = pneg %p123
    // Predicated region
    $region9: #{edge_aware_silu_forward.1} parent=5 // pred_check
      _
    $region10: #{edge_aware_silu_forward.1} parent=5 // pred_check_branch
      %126 = sbr.rel (%p123) target = $region12
    $region11: #{edge_aware_silu_forward.1} parent=5 // pred_region
      %s127 = ssub.s32 %s9, 1
    $region12: #{edge_aware_silu_forward.1} parent=5 // pred_fallthru
      _
    %p128 = scmp.lt.s32.totalorder %s9, 2
    // Predicated region
    $region13: #{edge_aware_silu_forward.1} parent=5 // pred_check
      %p129 = pneg %p128
    $region14: #{edge_aware_silu_forward.1} parent=5 // pred_check_branch
      %131 = sbr.rel (%p129) target = $region16
    $region15: #{edge_aware_silu_forward.1} parent=5 // pred_region
      // Predicated region
      $region17: #{edge_aware_silu_forward.1} parent=15 // pred_check
        %p132 = pneg %p29
      $region18: #{edge_aware_silu_forward.1} parent=15 // pred_check_branch
        %134 = sbr.rel (%p132) target = $region20
      $region19: #{edge_aware_silu_forward.1} parent=15 // pred_region
        %s135 = smul.u32 2, %s9
        %p136 = scmp.lt.s32.totalorder %s135, 3
        %s137 = scalar_select %p136, %s135, 3
        %s138 = smul.addr %s137, 2
        %s139 = smul.addr %s138, 8
        %s140 = scalar_lea.vmem %s0, %s139
        %s141 = smul.u32 2, %s9
      $region20: #{edge_aware_silu_forward.1} parent=15 // pred_fallthru
        _
      // Predicated region
      $region21: #{edge_aware_silu_forward.1} parent=15 // pred_check
        %p142 = pneg %p55
      $region22: #{edge_aware_silu_forward.1} parent=15 // pred_check_branch
        %144 = sbr.rel (%p142) target = $region24
      $region23: #{edge_aware_silu_forward.1} parent=15 // pred_region
        %s145 = smul.u32 2, %s9
        %p146 = scmp.lt.s32.totalorder %s145, 3
        %s147 = scalar_select %p146, %s145, 3
        %s148 = smul.addr %s147, 8
        %s149 = scalar_lea.vmem %s1, %s148
        %s150 = smul.u32 2, %s9
      $region24: #{edge_aware_silu_forward.1} parent=15 // pred_fallthru
        _
      // Predicated region
      $region25: #{edge_aware_silu_forward.1} parent=15 // pred_check
        %p151 = pneg %p81
      $region26: #{edge_aware_silu_forward.1} parent=15 // pred_check_branch
        %153 = sbr.rel (%p151) target = $region28
      $region27: #{edge_aware_silu_forward.1} parent=15 // pred_region
        %s154 = smul.u32 2, %s9
        %p155 = scmp.lt.s32.totalorder %s154, 3
        %s156 = scalar_select %p155, %s154, 3
        %s157 = smul.addr %s156, 8
        %s158 = scalar_lea.vmem %s2, %s157
        %s159 = smul.u32 2, %s9
      $region28: #{edge_aware_silu_forward.1} parent=15 // pred_fallthru
        _
    $region16: #{edge_aware_silu_forward.1} parent=5 // pred_fallthru
      _
    %p160 = scmp.le.s32.totalorder 1, %s9
    %p161 = scmp.lt.s32.totalorder %s9, 3
    %p162 = pnand %p160, %p161
    %p163 = pneg %p162
    // Predicated region
    $region29: #{edge_aware_silu_forward.1} parent=5 // pred_check
      _
    $region30: #{edge_aware_silu_forward.1} parent=5 // pred_check_branch
      %165 = sbr.rel (%p162) target = $region32
    $region31: #{edge_aware_silu_forward.1} parent=5 // pred_region
      %s166 = ssub.s32 %s9, 1
      %s167 = smul.u32 2, %s14
      %p168 = scmp.lt.s32.totalorder %s167, 3
      %s169 = scalar_select %p168, %s167, 3
      %s170 = smul.addr %s169, 2
      %s171 = smul.addr %s170, 8
      %s172 = scalar_lea.vmem %s0, %s171
      %p173 = pneg %p35
      %p174 = pneg %p32
      %s175 = smul.u32 2, %s14
      %p176 = scmp.lt.s32.totalorder %s175, 3
      %s177 = scalar_select %p176, %s175, 3
      %s178 = smul.addr %s177, 8
      %s179 = scalar_lea.vmem %s1, %s178
      %p180 = pneg %p61
      %p181 = pneg %p58
      %s182 = smul.u32 2, %s14
      %p183 = scmp.lt.s32.totalorder %s182, 3
      %s184 = scalar_select %p183, %s182, 3
      %s185 = smul.addr %s184, 8
      %s186 = scalar_lea.vmem %s2, %s185
      %p187 = pneg %p87
      %p188 = pneg %p84
      %p189 = pneg %p113
      %p190 = pneg %p110
      %s191 = smul.u32 2, %s14
      %p192 = scmp.lt.s32.totalorder %s191, 3
      %s193 = scalar_select %p192, %s191, 3
      %s194 = smul.addr %s193, 2
      %s195 = smul.addr %s194, 8
      %s196 = scalar_lea.vmem %s3, %s195
      %s197 = smul.u32 2, %s14
      %p198 = scmp.lt.s32.totalorder %s197, 3
      %s199 = scalar_select %p198, %s197, 3
      %s200 = smul.addr %s199, 2
      %s201 = smul.addr %s200, 8
      %s202 = scalar_lea.vmem %s0, %s201
      %s203 = smul.u32 2, %s14
      %s204 = smul.u32 2, %s14
      %p205 = scmp.lt.s32.totalorder %s204, 3
      %s206 = scalar_select %p205, %s204, 3
      %s207 = smul.addr %s206, 8
      %s208 = scalar_lea.vmem %s1, %s207
      %s209 = smul.u32 2, %s14
      %s210 = smul.u32 2, %s14
      %p211 = scmp.lt.s32.totalorder %s210, 3
      %s212 = scalar_select %p211, %s210, 3
      %s213 = smul.addr %s212, 8
      %s214 = scalar_lea.vmem %s2, %s213
      %s215 = smul.u32 2, %s14
      %s216 = smul.u32 2, %s14
      %p217 = scmp.lt.s32.totalorder %s216, 3
      %s218 = scalar_select %p217, %s216, 3
      %s219 = smul.addr %s218, 2
      %s220 = smul.addr %s219, 8
      %s221 = scalar_lea.vmem %s3, %s220
      %s222 = smul.u32 2, %s14
      %v223 = vld [vmem:[%s202] sm:$0xff]
      %v224 = vld [vmem:[%s202 + $0x8] sm:$0xff]
      %v225 = vld [vmem:[%s202 + $0x10] sm:$0xff]
      %v226 = vld [vmem:[%s202 + $0x18] sm:$0xff]
      %v227 = vld [vmem:[%s208] sm:$0xff]
      %v228 = vld [vmem:[%s208 + $0x8] sm:$0xff]
      %v229 = vlaneseq
      %v230 = vand.u32 %v229, 127
      %v231 = vadd.s32 %v230, 128
      %v232 = vand.u32 %v230, 15
      %v233 = vand.u32 %v231, 15
      %vm234 = vcmp.ge.s32.totalorder %v232, 1
      %vm235 = vcmp.ge.s32.totalorder %v233, 1
      %v236 = vsel %vm234, 1, 0
      %v237 = vsel %vm235, 1, 0
      %v238 = vcvt.s32.f32 %v236
      %v239 = vcvt.s32.f32 %v237
      %vm240 = vcmp.le.s32.totalorder %v232, 14
      %vm241 = vcmp.le.s32.totalorder %v233, 14
      %v242 = vsel %vm240, 1, 0
      %v243 = vsel %vm241, 1, 0
      %v244 = vcvt.s32.f32 %v242
      %v245 = vcvt.s32.f32 %v243
      %vm246 = vcmp.ge.s32.totalorder %v230, 16
      %vm247 = vcmp.ge.s32.totalorder %v231, 16
      %v248 = vsel %vm246, 1, 0
      %v249 = vsel %vm247, 1, 0
      %v250 = vcvt.s32.f32 %v248
      %v251 = vcvt.s32.f32 %v249
      %vm252 = vcmp.lt.s32.totalorder %v230, 240
      %vm253 = vcmp.lt.s32.totalorder %v231, 240
      %v254 = vsel %vm252, 1, 0
      %v255 = vsel %vm253, 1, 0
      %v256 = vcvt.s32.f32 %v254
      %v257 = vcvt.s32.f32 %v255
      %258 = vrot.lane.b32.xlu0 %v223, 1
      %v259 = vpop.permute.xlu0 %258
      %260 = vrot.lane.b32.xlu0 %v225, 1
      %v261 = vpop.permute.xlu0 %260
      %262 = vrot.lane.b32.xlu0 %v224, 1
      %v263 = vpop.permute.xlu0 %262
      %264 = vrot.lane.b32.xlu0 %v226, 1
      %v265 = vpop.permute.xlu0 %264
      %vm266 = vcmp.lt.s32.totalorder %v230, 1
      %v267 = vsel %vm266, %v259, %v263
      %v268 = vsel %vm266, %v261, %v265
      %v269 = vsel %vm266, %v263, %v259
      %v270 = vsel %vm266, %v265, %v261
      %v271 = vmul.f32 %v269, %v238
      %v272 = vmul.f32 %v267, %v239
      %v273 = vmul.f32 %v270, %v238
      %v274 = vmul.f32 %v268, %v239
      %275 = vrot.lane.b32.xlu0 %v223, 127
      %v276 = vpop.permute.xlu0 %275
      %277 = vrot.lane.b32.xlu0 %v225, 127
      %v278 = vpop.permute.xlu0 %277
      %279 = vrot.lane.b32.xlu0 %v224, 127
      %v280 = vpop.permute.xlu0 %279
      %281 = vrot.lane.b32.xlu0 %v226, 127
      %v282 = vpop.permute.xlu0 %281
      %vm283 = vcmp.lt.s32.totalorder %v230, 127
      %v284 = vsel %vm283, %v276, %v280
      %v285 = vsel %vm283, %v278, %v282
      %v286 = vsel %vm283, %v280, %v276
      %v287 = vsel %vm283, %v282, %v278
      %v288 = vmul.f32 %v284, %v244
      %v289 = vmul.f32 %v286, %v245
      %v290 = vmul.f32 %v285, %v244
      %v291 = vmul.f32 %v287, %v245
      %293 = vset.pattern.permute.xlu0 0
      %294 = vperm.xlu0 %293, %v227
      %v295 = vpop.permute.xlu0 %294
      %298 = vset.pattern.permute.xlu0 0
      %299 = vperm.xlu0 %298, %v228
      %v300 = vpop.permute.xlu0 %299
      %v302 = vmul.f32 %v271, %v295
      %v303 = vmul.f32 %v272, %v295
      %v304 = vmul.f32 %v273, %v300
      %v305 = vmul.f32 %v274, %v300
      %306 = vset.pattern.permute.xlu0 1
      %307 = vperm.xlu0 %306, %v227
      %v308 = vpop.permute.xlu0 %307
      %310 = vset.pattern.permute.xlu0 1
      %311 = vperm.xlu0 %310, %v228
      %v312 = vpop.permute.xlu0 %311
      %v314 = vmul.f32 %v223, %v308
      %v315 = vmul.f32 %v224, %v308
      %v316 = vmul.f32 %v225, %v312
      %v317 = vmul.f32 %v226, %v312
      %v318 = vadd.f32 %v302, %v314
      %v319 = vadd.f32 %v303, %v315
      %v320 = vadd.f32 %v304, %v316
      %v321 = vadd.f32 %v305, %v317
      %322 = vset.pattern.permute.xlu0 2
      %323 = vperm.xlu0 %322, %v227
      %v324 = vpop.permute.xlu0 %323
      %326 = vset.pattern.permute.xlu0 2
      %327 = vperm.xlu0 %326, %v228
      %v328 = vpop.permute.xlu0 %327
      %v330 = vmul.f32 %v288, %v324
      %v331 = vmul.f32 %v289, %v324
      %v332 = vmul.f32 %v290, %v328
      %v333 = vmul.f32 %v291, %v328
      %v334 = vadd.f32 %v318, %v330
      %v335 = vadd.f32 %v319, %v331
      %v336 = vadd.f32 %v320, %v332
      %v337 = vadd.f32 %v321, %v333
      %338 = vset.pattern.permute.xlu0 3
      %339 = vperm.xlu0 %338, %v227
      %v340 = vpop.permute.xlu0 %339
      %342 = vset.pattern.permute.xlu0 3
      %343 = vperm.xlu0 %342, %v228
      %v344 = vpop.permute.xlu0 %343
      %v346 = vmul.f32 %v271, %v340
      %v347 = vmul.f32 %v272, %v340
      %v348 = vmul.f32 %v273, %v344
      %v349 = vmul.f32 %v274, %v344
      %350 = vset.pattern.permute.xlu0 4
      %351 = vperm.xlu0 %350, %v227
      %v352 = vpop.permute.xlu0 %351
      %354 = vset.pattern.permute.xlu0 4
      %355 = vperm.xlu0 %354, %v228
      %v356 = vpop.permute.xlu0 %355
      %v358 = vmul.f32 %v223, %v352
      %v359 = vmul.f32 %v224, %v352
      %v360 = vmul.f32 %v225, %v356
      %v361 = vmul.f32 %v226, %v356
      %v362 = vadd.f32 %v346, %v358
      %v363 = vadd.f32 %v347, %v359
      %v364 = vadd.f32 %v348, %v360
      %v365 = vadd.f32 %v349, %v361
      %366 = vset.pattern.permute.xlu0 5
      %367 = vperm.xlu0 %366, %v227
      %v368 = vpop.permute.xlu0 %367
      %370 = vset.pattern.permute.xlu0 5
      %371 = vperm.xlu0 %370, %v228
      %v372 = vpop.permute.xlu0 %371
      %v374 = vmul.f32 %v288, %v368
      %v375 = vmul.f32 %v289, %v368
      %v376 = vmul.f32 %v290, %v372
      %v377 = vmul.f32 %v291, %v372
      %v378 = vadd.f32 %v362, %v374
      %v379 = vadd.f32 %v363, %v375
      %v380 = vadd.f32 %v364, %v376
      %v381 = vadd.f32 %v365, %v377
      %382 = vset.pattern.permute.xlu0 6
      %383 = vperm.xlu0 %382, %v227
      %v384 = vpop.permute.xlu0 %383
      %386 = vset.pattern.permute.xlu0 6
      %387 = vperm.xlu0 %386, %v228
      %v388 = vpop.permute.xlu0 %387
      %v390 = vmul.f32 %v271, %v384
      %v391 = vmul.f32 %v272, %v384
      %v392 = vmul.f32 %v273, %v388
      %v393 = vmul.f32 %v274, %v388
      %394 = vset.pattern.permute.xlu0 7
      %395 = vperm.xlu0 %394, %v227
      %v396 = vpop.permute.xlu0 %395
      %398 = vset.pattern.permute.xlu0 7
      %399 = vperm.xlu0 %398, %v228
      %v400 = vpop.permute.xlu0 %399
      %v402 = vmul.f32 %v223, %v396
      %v403 = vmul.f32 %v224, %v396
      %v404 = vmul.f32 %v225, %v400
      %v405 = vmul.f32 %v226, %v400
      %v406 = vadd.f32 %v390, %v402
      %v407 = vadd.f32 %v391, %v403
      %v408 = vadd.f32 %v392, %v404
      %v409 = vadd.f32 %v393, %v405
      %410 = vset.pattern.permute.xlu0 8
      %411 = vperm.xlu0 %410, %v227
      %v412 = vpop.permute.xlu0 %411
      %414 = vset.pattern.permute.xlu0 8
      %415 = vperm.xlu0 %414, %v228
      %v416 = vpop.permute.xlu0 %415
      %v418 = vmul.f32 %v288, %v412
      %v419 = vmul.f32 %v289, %v412
      %v420 = vmul.f32 %v290, %v416
      %v421 = vmul.f32 %v291, %v416
      %v422 = vadd.f32 %v406, %v418
      %v423 = vadd.f32 %v407, %v419
      %v424 = vadd.f32 %v408, %v420
      %v425 = vadd.f32 %v409, %v421
      %426 = vrot.lane.b32.xlu0 %v334, 16
      %v427 = vpop.permute.xlu0 %426
      %428 = vrot.lane.b32.xlu0 %v336, 16
      %v429 = vpop.permute.xlu0 %428
      %430 = vrot.lane.b32.xlu0 %v335, 16
      %v431 = vpop.permute.xlu0 %430
      %432 = vrot.lane.b32.xlu0 %v337, 16
      %v433 = vpop.permute.xlu0 %432
      %vm434 = vcmp.lt.s32.totalorder %v230, 16
      %v435 = vsel %vm434, %v427, %v431
      %v436 = vsel %vm434, %v429, %v433
      %v437 = vsel %vm434, %v431, %v427
      %v438 = vsel %vm434, %v433, %v429
      %v439 = vmul.f32 %v437, %v250
      %v440 = vmul.f32 %v435, %v251
      %v441 = vmul.f32 %v438, %v250
      %v442 = vmul.f32 %v436, %v251
      %v443 = vadd.f32 %v378, %v439
      %v444 = vadd.f32 %v379, %v440
      %v445 = vadd.f32 %v380, %v441
      %v446 = vadd.f32 %v381, %v442
      %447 = vrot.lane.b32.xlu0 %v422, 112
      %v448 = vpop.permute.xlu0 %447
      %449 = vrot.lane.b32.xlu0 %v424, 112
      %v450 = vpop.permute.xlu0 %449
      %451 = vrot.lane.b32.xlu0 %v423, 112
      %v452 = vpop.permute.xlu0 %451
      %453 = vrot.lane.b32.xlu0 %v425, 112
      %v454 = vpop.permute.xlu0 %453
      %vm455 = vcmp.lt.s32.totalorder %v230, 112
      %v456 = vsel %vm455, %v448, %v452
      %v457 = vsel %vm455, %v450, %v454
      %v458 = vsel %vm455, %v452, %v448
      %v459 = vsel %vm455, %v454, %v450
      %v460 = vmul.f32 %v456, %v256
      %v461 = vmul.f32 %v458, %v257
      %v462 = vmul.f32 %v457, %v256
      %v463 = vmul.f32 %v459, %v257
      %v464 = vadd.f32 %v443, %v460
      %v465 = vadd.f32 %v444, %v461
      %v466 = vadd.f32 %v445, %v462
      %v467 = vadd.f32 %v446, %v463
      %v468 = vld [vmem:[%s214] sm:$0xff]
      %v469 = vld [vmem:[%s214 + $0x8] sm:$0xff]
      %471 = vset.pattern.permute.xlu0 0
      %472 = vperm.xlu0 %471, %v468
      %v473 = vpop.permute.xlu0 %472
      %476 = vset.pattern.permute.xlu0 0
      %477 = vperm.xlu0 %476, %v469
      %v478 = vpop.permute.xlu0 %477
      %v480 = vadd.f32 %v464, %v473
      %v481 = vadd.f32 %v465, %v473
      %v482 = vadd.f32 %v466, %v478
      %v483 = vadd.f32 %v467, %v478
      %v484 = vsub.f32 0.0, %v480
      %v485 = vsub.f32 0.0, %v481
      %v486 = vsub.f32 0.0, %v482
      %v487 = vsub.f32 0.0, %v483
      %v488 = vmul.f32 %v484, 1.442695
      %v489 = vpow.pop %v488
      %v490 = vmul.f32 %v485, 1.442695
      %v491 = vpow.pop %v490
      %v492 = vmul.f32 %v486, 1.442695
      %v493 = vpow.pop %v492
      %v494 = vmul.f32 %v487, 1.442695
      %v495 = vpow.pop %v494
      %v496 = vadd.f32 %v489, 1.0
      %v497 = vadd.f32 %v491, 1.0
      %v498 = vadd.f32 %v493, 1.0
      %v499 = vadd.f32 %v495, 1.0
      %v500 = vrcp.pop %v496
      %v501 = vmul.f32 1.0, %v500
      %v502 = vrcp.pop %v497
      %v503 = vmul.f32 1.0, %v502
      %v504 = vrcp.pop %v498
      %v505 = vmul.f32 1.0, %v504
      %v506 = vrcp.pop %v499
      %v507 = vmul.f32 1.0, %v506
      %v508 = vmul.f32 %v223, %v501
      %v509 = vmul.f32 %v224, %v503
      %v510 = vmul.f32 %v225, %v505
      %v511 = vmul.f32 %v226, %v507
      %512 = vst [vmem:[%s221] sm:$0xff] %v508
      %513 = vst [vmem:[%s221 + $0x8] sm:$0xff] %v509
      %514 = vst [vmem:[%s221 + $0x10] sm:$0xff] %v510
      %515 = vst [vmem:[%s221 + $0x18] sm:$0xff] %v511
      %s516 = smul.u32 2, %s14
      %p517 = scmp.lt.s32.totalorder %s516, 3
      %s518 = scalar_select %p517, %s516, 3
      %s519 = smul.addr %s518, 2
      %s520 = smul.addr %s519, 8
      %s521 = scalar_lea.vmem %s3, %s520
      // Predicated region
      $region33: #{edge_aware_silu_forward.1} parent=31 // pred_check
        %p522 = pneg %p110
      $region34: #{edge_aware_silu_forward.1} parent=31 // pred_check_branch
        %524 = sbr.rel (%p522) target = $region36
      $region35: #{edge_aware_silu_forward.1} parent=31 // pred_region
        %s525 = smul.u32 2, %s14
      $region36: #{edge_aware_silu_forward.1} parent=31 // pred_fallthru
        _
    $region32: #{edge_aware_silu_forward.1} parent=5 // pred_fallthru
      _
    %p526 = scmp.le.s32.totalorder 2, %s9
    // Predicated region
    $region37: #{edge_aware_silu_forward.1} parent=5 // pred_check
      %p527 = pneg %p526
    $region38: #{edge_aware_silu_forward.1} parent=5 // pred_check_branch
      %529 = sbr.rel (%p527) target = $region40
    $region39: #{edge_aware_silu_forward.1} parent=5 // pred_region
      %s530 = ssub.s32 %s9, 2
      // Predicated region
      $region41: #{edge_aware_silu_forward.1} parent=39 // pred_check
        %p531 = pneg %p116
      $region42: #{edge_aware_silu_forward.1} parent=39 // pred_check_branch
        %533 = sbr.rel (%p531) target = $region44
      $region43: #{edge_aware_silu_forward.1} parent=39 // pred_region
        %s534 = smul.u32 2, %s15
        %p535 = scmp.lt.s32.totalorder %s534, 3
        %s536 = scalar_select %p535, %s534, 3
        %s537 = smul.addr %s536, 2
        %s538 = smul.addr %s537, 8
        %s539 = scalar_lea.vmem %s3, %s538
      $region44: #{edge_aware_silu_forward.1} parent=39 // pred_fallthru
        _
    $region40: #{edge_aware_silu_forward.1} parent=5 // pred_fallthru
      _
  $region6: #{edge_aware_silu_forward.1} parent=0 // loop_footer
    %s13 = sadd.s32 1, %s9
  $region7: #{edge_aware_silu_forward.1} parent=0 // loop_footer_branch
    %8 = sbr.rel target = $region3
  $region8: #{edge_aware_silu_forward.1} parent=0 // loop_exit
    _

</llo_original>
